<compile_context>
chip_gen: v5e
topology: v5e:2x2
jax: 0.10.0
libtpu: 0.0.40
codegen_flags: <defaults>
</compile_context>

<pallas_src>
import math
from functools import partial

import jax
import jax.numpy as jnp
from jax.experimental import pallas as pl
from jax.experimental.pallas import tpu as pltpu

_LANES = 128
_SUBLANES = 8
_MAX_BLOCK_ROWS = 8192      # 12 MiB of f32 inputs per grid step (double-buffered 24 MiB)
_CHUNK_ROWS = 512           # in-block sub-chunk: bounds VMEM temporaries / vreg pressure
_VALID_LOSS_TYPES = ("qd_soft", "qd_hard", "gauss_like", "picp", "mse")

# Exact contribution of one zero-padded element (y_U = y_L = y_T = 0) to the
# accumulated `extra` sum; subtracted once in the wrapper (no in-kernel mask).
_PAD_EXTRA = {
    "qd_soft": 0.25,                              # sigmoid(0)^2
    "gauss_like": 0.5 * math.log(math.log(2.0)),  # log(softplus(0))/2 + 0
    "qd_hard": 0.0,
    "picp": 0.0,
    "mse": 0.0,                                   # (0 - 0)^2
}


def _round_up(x, m):
    return -(-x // m) * m


def _make_kernel(loss_type, soften, block_rows, chunk_rows):
    """Build the kernel body; all configuration is static / closed over."""
    need_absw = loss_type in ("qd_soft", "qd_hard")
    need_extra = loss_type in ("qd_soft", "mse", "gauss_like")
    num_chunks = block_rows // chunk_rows
    half_soften = 0.5 * float(soften)

    def kernel(yp_ref, yt_ref, out_ref, acc_ref):
        j = pl.program_id(1)

        @pl.when(j == 0)
        def _init():
            acc_ref[...] = jnp.zeros_like(acc_ref)

        def accumulate(row_off):
            # Operands viewed as (chunk/8, 8, 128): the per-chunk reduction is a
            # plain vadd chain over axis 0 and each accumulator update is an
            # unmasked full-(8,128)-tile store.
            shp = (chunk_rows // _SUBLANES, _SUBLANES, _LANES)
            y_u = yp_ref[0, pl.ds(row_off, chunk_rows), :].astype(jnp.float32).reshape(shp)
            y_l = yp_ref[1, pl.ds(row_off, chunk_rows), :].astype(jnp.float32).reshape(shp)
            y_t = yt_ref[pl.ds(row_off, chunk_rows), :].astype(jnp.float32).reshape(shp)

            width = y_u - y_l
            acc_ref[0] += jnp.sum(width, axis=0)

            # hard coverage: 1 iff y_U > y_T and y_T > y_L (== max(0, sign(.)) product)
            gamma_hard = jnp.logical_and(y_u > y_t, y_t > y_l).astype(jnp.float32)
            acc_ref[1] += jnp.sum(gamma_hard, axis=0)

            if need_absw:
                acc_ref[2] += jnp.sum(jnp.abs(width) * gamma_hard, axis=0)

            if need_extra:
                if loss_type == "qd_soft":
                    # sigmoid(a)*sigmoid(b) == 0.25*(1+tanh(a/2))*(1+tanh(b/2))
                    extra = 0.25 * ((1.0 + jnp.tanh((y_u - y_t) * half_soften))
                                    * (1.0 + jnp.tanh((y_t - y_l) * half_soften)))
                elif loss_type == "mse":
                    d = y_u - y_t
                    extra = d * d
                else:  # gauss_like
                    y_var = jnp.maximum(
                        jnp.log(1.0 + jnp.exp(jnp.minimum(y_l, 10.0))), 1e-5)
                    d = y_t - y_u
                    extra = 0.5 * jnp.log(y_var) + d * d / (2.0 * y_var)
                acc_ref[3] += jnp.sum(extra, axis=0)

        if num_chunks == 1:
            accumulate(0)
        else:
            @pl.loop(0, num_chunks)
            def _chunks(c):
                accumulate(pl.multiple_of(c * chunk_rows, _SUBLANES))

        @pl.when(j == pl.num_programs(1) - 1)
        def _finalize():
            # one small cross-sublane collapse per outer slice; the lane
            # reduction and the scalar loss math happen in the wrapper.
            out_ref[...] = jnp.sum(acc_ref[...], axis=1).reshape(1, 4, _LANES)

    return kernel


@partial(jax.jit,
         static_argnames=("alpha", "soften", "lambda_", "loss_type", "block_rows"))
def qd_loss(y_pred, y_true, *, alpha=0.1, soften=100.0, lambda_=10.0,
            loss_type="qd_soft", block_rows=_MAX_BLOCK_ROWS):
    """Pallas equivalent of Loss.forward (type_in='pred_intervals').

    y_pred: (N, 2) module layout (col 0 = y_U, col 1 = y_L) -- one fused
            transpose pass -- or (2, N) producer layout (zero extra HBM passes).
    y_true: (N, 1) or (N,).
    Returns (loss, PICP, MPIW) as float32 scalars.
    """
    if loss_type not in _VALID_LOSS_TYPES:
        raise ValueError(f"unknown loss_type {loss_type!r}")

    y_pred = jnp.asarray(y_pred)
    y_true = jnp.asarray(y_true)
    if y_pred.ndim != 2 or 2 not in y_pred.shape:
        raise ValueError("y_pred must be (N, 2) or (2, N)")
    if y_pred.shape[0] == 2 and y_pred.shape[1] != 2:
        yp = y_pred                       # (2, N) producer layout: no copy
    else:
        yp = y_pred.T                     # module layout: one fused transpose pass
    n = yp.shape[1]
    yt = y_true.reshape(n)                # (N,1)->(N,) is free

    def _storage(x):
        # keep bf16 / f32 as-is (bf16 halves HBM traffic); everything else -> f32
        return x if x.dtype in (jnp.float32, jnp.bfloat16) else x.astype(jnp.float32)
    yp = _storage(yp)
    yt = _storage(yt)

    # ---- tiling --------------------------------------------------------------
    rows = pl.cdiv(n, _LANES)                       # 128-lane rows of samples
    n_outer = 2 if rows >= 2 * _SUBLANES else 1     # feeds both TCs on v7x
    rows_per_outer = pl.cdiv(rows, n_outer)

    br = max(_SUBLANES, _round_up(min(int(block_rows), _MAX_BLOCK_ROWS), _SUBLANES))
    br = min(br, _round_up(rows_per_outer, _SUBLANES))
    if br > _CHUNK_ROWS:
        br = _round_up(br, _CHUNK_ROWS)
    chunk_rows = min(br, _CHUNK_ROWS)
    n_inner = pl.cdiv(rows_per_outer, br)
    total_rows = n_outer * n_inner * br
    padded = total_rows * _LANES

    # zero padding: padded elements contribute exactly 0 to the width /
    # gamma_hard / |w|*gamma_hard sums and a compile-time constant to `extra`
    # (corrected below).  When N already tiles, no pad copy is issued at all.
    if padded != n:
        yp = jnp.pad(yp, ((0, 0), (0, padded - n)))
        yt = jnp.pad(yt, (0, padded - n))
    yp = yp.reshape(2, total_rows, _LANES)          # free reshape (contiguous)
    yt = yt.reshape(total_rows, _LANES)

    kernel = _make_kernel(loss_type, soften, br, chunk_rows)

    bytes_per = 2 if yp.dtype == jnp.bfloat16 else 4
    step_bytes = 3 * br * _LANES * bytes_per        # yp block (2*br*128) + yt block
    # double-buffered inputs + headroom; capped at 48 MiB (64 MiB physical on v7x)
    vmem_limit = int(min(48 << 20, max(32 << 20, 2 * step_bytes + (16 << 20))))

    partials = pl.pallas_call(
        kernel,
        out_shape=jax.ShapeDtypeStruct((n_outer, 4, _LANES), jnp.float32),
        grid_spec=pltpu.PrefetchScalarGridSpec(
            num_scalar_prefetch=0,
            grid=(n_outer, n_inner),
            in_specs=[
                pl.BlockSpec((2, br, _LANES), lambda i, j: (0, i * n_inner + j, 0)),
                pl.BlockSpec((br, _LANES), lambda i, j: (i * n_inner + j, 0)),
            ],
            out_specs=pl.BlockSpec((1, 4, _LANES), lambda i, j: (i, 0, 0)),
            scratch_shapes=[pltpu.VMEM((4, _SUBLANES, _LANES), jnp.float32)],
        ),
        compiler_params=pltpu.CompilerParams(
            dimension_semantics=("parallel", "arbitrary"),
            vmem_limit_bytes=vmem_limit),
    )(yp, yt)

    # ---- O(1) finalize (fused under jit) -------------------------------------
    sums = jnp.sum(partials, axis=(0, 2))           # (4,)
    sum_width, sum_gh, sum_awgh, sum_extra = sums[0], sums[1], sums[2], sums[3]
    n_pad = padded - n
    if n_pad and _PAD_EXTRA[loss_type] != 0.0:
        sum_extra = sum_extra - jnp.float32(_PAD_EXTRA[loss_type] * n_pad)

    inv_n = jnp.float32(1.0 / n)
    mpiw = sum_width * inv_n
    picp = sum_gh * inv_n                           # PICP_hard (returned metric)
    if loss_type in ("qd_soft", "qd_hard"):
        qd_lhs_hard = (sum_awgh * inv_n) / (picp + 0.001)
        picp_pen = sum_extra * inv_n if loss_type == "qd_soft" else picp
        pen = jnp.maximum(0.0, (1.0 - alpha) - picp_pen)
        loss = qd_lhs_hard + (lambda_ * math.sqrt(n)) * pen * pen
    elif loss_type == "picp":
        loss = picp
    else:  # "mse" or "gauss_like"
        loss = sum_extra * inv_n
    return loss, picp, mpiw


# ------------------------------ reference & demo ------------------------------

def _reference(y_pred_nx2, y_true_nx1, *, alpha=0.1, soften=100.0, lambda_=10.0,
               loss_type="qd_soft"):
    """Pure-JAX mirror of the torch module (module layout inputs)."""
    y_u = y_pred_nx2[:, 0].astype(jnp.float32)
    y_l = y_pred_nx2[:, 1].astype(jnp.float32)
    y_t = y_true_nx1[:, 0].astype(jnp.float32)
    n = y_t.shape[0]
    mpiw = jnp.mean(y_u - y_l)
    gamma_soft = (jax.nn.sigmoid((y_u - y_t) * soften)
                  * jax.nn.sigmoid((y_t - y_l) * soften))
    gamma_hard = (jnp.maximum(0.0, jnp.sign(y_u - y_t))
                  * jnp.maximum(0.0, jnp.sign(y_t - y_l)))
    picp_soft = jnp.mean(gamma_soft)
    picp_hard = jnp.mean(gamma_hard)
    qd_lhs_hard = jnp.mean(jnp.abs(y_u - y_l) * gamma_hard) / (picp_hard + 0.001)
    rhs_soft = lambda_ * math.sqrt(n) * jnp.maximum(0.0, 1.0 - alpha - picp_soft) ** 2
    rhs_hard = lambda_ * math.sqrt(n) * jnp.maximum(0.0, 1.0 - alpha - picp_hard) ** 2
    y_var = jnp.maximum(jnp.log(1.0 + jnp.exp(jnp.minimum(y_l, 10.0))), 1e-5)
    gauss = jnp.mean(jnp.log(y_var) / 2.0 + (y_t - y_u) ** 2 / (2.0 * y_var))
    if loss_type == "qd_soft":
        loss = qd_lhs_hard + rhs_soft
    elif loss_type == "qd_hard":
        loss = qd_lhs_hard + rhs_hard
    elif loss_type == "gauss_like":
        loss = gauss
    elif loss_type == "picp":
        loss = picp_hard
    else:  # mse
        loss = jnp.mean((y_u - y_t) ** 2)
    return loss, picp_hard, mpiw


def _make_intervals(key, n):
    k1, k2 = jax.random.split(key)
    raw = jax.random.normal(k1, (n, 2), dtype=jnp.float32)
    y_pred = jnp.stack(
        [jnp.maximum(raw[:, 0], raw[:, 1]) + 0.5,
         jnp.minimum(raw[:, 0], raw[:, 1]) - 0.5], axis=1)      # (N, 2) module layout
    y_true = jax.random.normal(k2, (n, 1), dtype=jnp.float32)   # (N, 1)
    return y_pred, y_true


def _check(got, want, *, atol, rtol, what):
    ok = bool(jnp.allclose(got, want, atol=atol, rtol=rtol))
    assert ok, f"{what}: got {float(got)} want {float(want)}"


def _check_triple(got, want, what):
    names = ("loss", "picp", "mpiw")
    tols = ((2e-4, 2e-4), (1e-5, 1e-5), (1e-5, 1e-5))
    for g, w, nm, (atol, rtol) in zip(got, want, names, tols):
        _check(g, w, atol=atol, rtol=rtol, what=f"{what} {nm}")


if __name__ == "__main__":
    key = jax.random.PRNGKey(0)
    k1, k2, k3, k4 = jax.random.split(key, 4)

    # Case 1: tiny module-layout batch (N,2)/(N,1); single grid step + heavy
    # zero padding -> exercises the constant padding correction for qd_soft.
    N1 = 8
    yp1, yt1 = _make_intervals(k1, N1)
    out1 = qd_loss(yp1, yt1)
    jax.block_until_ready(out1)
    _check_triple(out1, _reference(yp1, yt1), "case1 qd_soft")

    # Case 2: producer layout (2,N)/(N,) with N a multiple of the tile -> no
    # transpose, no pad; small block_rows exercises grid (2, 2) including the
    # parallel outer axis and the persistent accumulator.
    N2 = 4096
    raw = jax.random.normal(k2, (2, N2), dtype=jnp.float32)
    y_u2 = jnp.maximum(raw[0], raw[1]) + 0.5
    y_l2 = jnp.minimum(raw[0], raw[1]) - 0.5
    yp2_fast = jnp.stack([y_u2, y_l2], axis=0)          # (2, N)
    yt2_flat = jax.random.normal(k3, (N2,), dtype=jnp.float32)
    out2 = qd_loss(yp2_fast, yt2_flat, block_rows=8)
    jax.block_until_ready(out2)
    yp2_mod = jnp.stack([y_u2, y_l2], axis=1)           # (N, 2) for the reference
    _check_triple(out2, _reference(yp2_mod, yt2_flat[:, None]), "case2 qd_soft fast")

    # Module layout of the same data must agree with the fast-path result.
    out2b = qd_loss(yp2_mod, yt2_flat[:, None], block_rows=8)
    jax.block_until_ready(out2b)
    _check_triple(out2b, out2, "case2 layout consistency")

    # Case 3: ragged N (not a multiple of 128) with a small block -> multi-step
    # grid on both axes plus padding; cover the other loss types.
    N3 = 2500
    yp3, yt3 = _make_intervals(k4, N3)
    for lt in ("gauss_like", "mse", "qd_hard"):
        out3 = qd_loss(yp3, yt3, loss_type=lt, block_rows=8)
        jax.block_until_ready(out3)
        _check_triple(out3, _reference(yp3, yt3, loss_type=lt), f"case3 {lt}")

    print("KERNEL_OK")
</pallas_src>

<mosaic_0001>
module attributes {stable_mosaic.version = 11 : i64} {
  func.func @kernel(%arg0: i32, %arg1: i32, %arg2: memref<2x8x128xf32, #tpu.memory_space<vmem>>, %arg3: memref<8x128xf32, #tpu.memory_space<vmem>>, %arg4: memref<1x4x128xf32, #tpu.memory_space<vmem>>, %arg5: memref<4x8x128xf32, #tpu.memory_space<vmem>>) attributes {dimension_semantics = [#tpu.dimension_semantics<parallel>, #tpu.dimension_semantics<arbitrary>], iteration_bounds = array<i64: 1, 1>, scalar_prefetch = 0 : i64, scratch_operands = 1 : i64, tpu.core_type = #tpu.core_type<tc>, window_params = [{transform_indices = @transform_0, window_bounds = array<i64: 2, 8, 128>}, {transform_indices = @transform_1, window_bounds = array<i64: 8, 128>}, {transform_indices = @transform_2, window_bounds = array<i64: 1, 4, 128>}]} {
    %c0_i32 = arith.constant 0 : i32
    %0 = arith.cmpi eq, %arg1, %c0_i32 : i32
    %1 = arith.extui %0 : i1 to i32
    %c0_i32_0 = arith.constant 0 : i32
    %2 = arith.cmpi ne, %1, %c0_i32_0 : i32
    scf.if %2 {
      %cst_39 = arith.constant 0.000000e+00 : f32
      %65 = vector.broadcast %cst_39 : f32 to vector<4x8x128xf32>
      %c0_40 = arith.constant 0 : index
      %c0_41 = arith.constant 0 : index
      %c0_42 = arith.constant 0 : index
      %66 = vector.load %arg5[%c0_40, %c0_41, %c0_42] : memref<4x8x128xf32, #tpu.memory_space<vmem>>, vector<4x8x128xf32>
      tpu.vector_store %arg5[%c0_40, %c0_41, %c0_42], %65 {strides = array<i32>} : memref<4x8x128xf32, #tpu.memory_space<vmem>>, vector<4x8x128xf32>,
    } else {
    }
    %c0 = arith.constant 0 : index
    %c0_1 = arith.constant 0 : index
    %c0_2 = arith.constant 0 : index
    %3 = vector.load %arg2[%c0, %c0_1, %c0_2] : memref<2x8x128xf32, #tpu.memory_space<vmem>>, vector<1x8x128xf32>
    %4 = vector.shape_cast %3 : vector<1x8x128xf32> to vector<8x128xf32>
    %5 = vector.shape_cast %4 : vector<8x128xf32> to vector<1x8x128xf32>
    %c1 = arith.constant 1 : index
    %c0_3 = arith.constant 0 : index
    %c0_4 = arith.constant 0 : index
    %6 = vector.load %arg2[%c1, %c0_3, %c0_4] : memref<2x8x128xf32, #tpu.memory_space<vmem>>, vector<1x8x128xf32>
    %7 = vector.shape_cast %6 : vector<1x8x128xf32> to vector<8x128xf32>
    %8 = vector.shape_cast %7 : vector<8x128xf32> to vector<1x8x128xf32>
    %c0_5 = arith.constant 0 : index
    %c0_6 = arith.constant 0 : index
    %9 = vector.load %arg3[%c0_5, %c0_6] : memref<8x128xf32, #tpu.memory_space<vmem>>, vector<8x128xf32>
    %10 = vector.shape_cast %9 : vector<8x128xf32> to vector<1x8x128xf32>
    %11 = arith.subf %5, %8 : vector<1x8x128xf32>
    %c0_7 = arith.constant 0 : index
    %c0_8 = arith.constant 0 : index
    %c0_9 = arith.constant 0 : index
    %12 = vector.load %arg5[%c0_7, %c0_8, %c0_9] : memref<4x8x128xf32, #tpu.memory_space<vmem>>, vector<1x8x128xf32>
    %13 = vector.shape_cast %12 : vector<1x8x128xf32> to vector<8x128xf32>
    %cst = arith.constant dense<0.000000e+00> : vector<8x128xf32>
    %14 = vector.multi_reduction <add>, %11, %cst [0] : vector<1x8x128xf32> to vector<8x128xf32>
    %15 = arith.addf %13, %14 : vector<8x128xf32>
    %c0_10 = arith.constant 0 : index
    %c0_11 = arith.constant 0 : index
    %c0_12 = arith.constant 0 : index
    %16 = vector.load %arg5[%c0_10, %c0_11, %c0_12] : memref<4x8x128xf32, #tpu.memory_space<vmem>>, vector<1x8x128xf32>
    %17 = vector.shape_cast %16 : vector<1x8x128xf32> to vector<8x128xf32>
    %18 = vector.shape_cast %15 : vector<8x128xf32> to vector<1x8x128xf32>
    tpu.vector_store %arg5[%c0_10, %c0_11, %c0_12], %18 {strides = array<i32>} : memref<4x8x128xf32, #tpu.memory_space<vmem>>, vector<1x8x128xf32>,
    %19 = arith.cmpf ogt, %5, %10 : vector<1x8x128xf32>
    %20 = arith.cmpf ogt, %10, %8 : vector<1x8x128xf32>
    %21 = arith.andi %19, %20 : vector<1x8x128xi1>
    %22 = arith.extui %21 : vector<1x8x128xi1> to vector<1x8x128xi32>
    %23 = arith.sitofp %22 : vector<1x8x128xi32> to vector<1x8x128xf32>
    %c1_13 = arith.constant 1 : index
    %c0_14 = arith.constant 0 : index
    %c0_15 = arith.constant 0 : index
    %24 = vector.load %arg5[%c1_13, %c0_14, %c0_15] : memref<4x8x128xf32, #tpu.memory_space<vmem>>, vector<1x8x128xf32>
    %25 = vector.shape_cast %24 : vector<1x8x128xf32> to vector<8x128xf32>
    %cst_16 = arith.constant dense<0.000000e+00> : vector<8x128xf32>
    %26 = vector.multi_reduction <add>, %23, %cst_16 [0] : vector<1x8x128xf32> to vector<8x128xf32>
    %27 = arith.addf %25, %26 : vector<8x128xf32>
    %c1_17 = arith.constant 1 : index
    %c0_18 = arith.constant 0 : index
    %c0_19 = arith.constant 0 : index
    %28 = vector.load %arg5[%c1_17, %c0_18, %c0_19] : memref<4x8x128xf32, #tpu.memory_space<vmem>>, vector<1x8x128xf32>
    %29 = vector.shape_cast %28 : vector<1x8x128xf32> to vector<8x128xf32>
    %30 = vector.shape_cast %27 : vector<8x128xf32> to vector<1x8x128xf32>
    tpu.vector_store %arg5[%c1_17, %c0_18, %c0_19], %30 {strides = array<i32>} : memref<4x8x128xf32, #tpu.memory_space<vmem>>, vector<1x8x128xf32>,
    %c2 = arith.constant 2 : index
    %c0_20 = arith.constant 0 : index
    %c0_21 = arith.constant 0 : index
    %31 = vector.load %arg5[%c2, %c0_20, %c0_21] : memref<4x8x128xf32, #tpu.memory_space<vmem>>, vector<1x8x128xf32>
    %32 = vector.shape_cast %31 : vector<1x8x128xf32> to vector<8x128xf32>
    %33 = math.absf %11 : vector<1x8x128xf32>
    %34 = arith.mulf %33, %23 : vector<1x8x128xf32>
    %cst_22 = arith.constant dense<0.000000e+00> : vector<8x128xf32>
    %35 = vector.multi_reduction <add>, %34, %cst_22 [0] : vector<1x8x128xf32> to vector<8x128xf32>
    %36 = arith.addf %32, %35 : vector<8x128xf32>
    %c2_23 = arith.constant 2 : index
    %c0_24 = arith.constant 0 : index
    %c0_25 = arith.constant 0 : index
    %37 = vector.load %arg5[%c2_23, %c0_24, %c0_25] : memref<4x8x128xf32, #tpu.memory_space<vmem>>, vector<1x8x128xf32>
    %38 = vector.shape_cast %37 : vector<1x8x128xf32> to vector<8x128xf32>
    %39 = vector.shape_cast %36 : vector<8x128xf32> to vector<1x8x128xf32>
    tpu.vector_store %arg5[%c2_23, %c0_24, %c0_25], %39 {strides = array<i32>} : memref<4x8x128xf32, #tpu.memory_space<vmem>>, vector<1x8x128xf32>,
    %40 = arith.subf %5, %10 : vector<1x8x128xf32>
    %cst_26 = arith.constant 5.000000e+01 : f32
    %41 = vector.broadcast %cst_26 : f32 to vector<1x8x128xf32>
    %42 = arith.mulf %40, %41 : vector<1x8x128xf32>
    %43 = math.tanh %42 : vector<1x8x128xf32>
    %cst_27 = arith.constant 1.000000e+00 : f32
    %44 = vector.broadcast %cst_27 : f32 to vector<1x8x128xf32>
    %45 = arith.addf %44, %43 : vector<1x8x128xf32>
    %46 = arith.subf %10, %8 : vector<1x8x128xf32>
    %cst_28 = arith.constant 5.000000e+01 : f32
    %47 = vector.broadcast %cst_28 : f32 to vector<1x8x128xf32>
    %48 = arith.mulf %46, %47 : vector<1x8x128xf32>
    %49 = math.tanh %48 : vector<1x8x128xf32>
    %cst_29 = arith.constant 1.000000e+00 : f32
    %50 = vector.broadcast %cst_29 : f32 to vector<1x8x128xf32>
    %51 = arith.addf %50, %49 : vector<1x8x128xf32>
    %52 = arith.mulf %45, %51 : vector<1x8x128xf32>
    %cst_30 = arith.constant 2.500000e-01 : f32
    %53 = vector.broadcast %cst_30 : f32 to vector<1x8x128xf32>
    %54 = arith.mulf %53, %52 : vector<1x8x128xf32>
    %c3 = arith.constant 3 : index
    %c0_31 = arith.constant 0 : index
    %c0_32 = arith.constant 0 : index
    %55 = vector.load %arg5[%c3, %c0_31, %c0_32] : memref<4x8x128xf32, #tpu.memory_space<vmem>>, vector<1x8x128xf32>
    %56 = vector.shape_cast %55 : vector<1x8x128xf32> to vector<8x128xf32>
    %cst_33 = arith.constant dense<0.000000e+00> : vector<8x128xf32>
    %57 = vector.multi_reduction <add>, %54, %cst_33 [0] : vector<1x8x128xf32> to vector<8x128xf32>
    %58 = arith.addf %56, %57 : vector<8x128xf32>
    %c3_34 = arith.constant 3 : index
    %c0_35 = arith.constant 0 : index
    %c0_36 = arith.constant 0 : index
    %59 = vector.load %arg5[%c3_34, %c0_35, %c0_36] : memref<4x8x128xf32, #tpu.memory_space<vmem>>, vector<1x8x128xf32>
    %60 = vector.shape_cast %59 : vector<1x8x128xf32> to vector<8x128xf32>
    %61 = vector.shape_cast %58 : vector<8x128xf32> to vector<1x8x128xf32>
    tpu.vector_store %arg5[%c3_34, %c0_35, %c0_36], %61 {strides = array<i32>} : memref<4x8x128xf32, #tpu.memory_space<vmem>>, vector<1x8x128xf32>,
    %c0_i32_37 = arith.constant 0 : i32
    %62 = arith.cmpi eq, %arg1, %c0_i32_37 : i32
    %63 = arith.extui %62 : i1 to i32
    %c0_i32_38 = arith.constant 0 : i32
    %64 = arith.cmpi ne, %63, %c0_i32_38 : i32
    scf.if %64 {
      %c0_39 = arith.constant 0 : index
      %c0_40 = arith.constant 0 : index
      %c0_41 = arith.constant 0 : index
      %65 = vector.load %arg5[%c0_39, %c0_40, %c0_41] : memref<4x8x128xf32, #tpu.memory_space<vmem>>, vector<4x8x128xf32>
      %cst_42 = arith.constant dense<0.000000e+00> : vector<4x128xf32>
      %66 = vector.multi_reduction <add>, %65, %cst_42 [1] : vector<4x8x128xf32> to vector<4x128xf32>
      %67 = vector.shape_cast %66 : vector<4x128xf32> to vector<1x4x128xf32>
      %c0_43 = arith.constant 0 : index
      %c0_44 = arith.constant 0 : index
      %c0_45 = arith.constant 0 : index
      %68 = vector.load %arg4[%c0_43, %c0_44, %c0_45] : memref<1x4x128xf32, #tpu.memory_space<vmem>>, vector<1x4x128xf32>
      tpu.vector_store %arg4[%c0_43, %c0_44, %c0_45], %67 {strides = array<i32>} : memref<1x4x128xf32, #tpu.memory_space<vmem>>, vector<1x4x128xf32>,
    } else {
    }
    return
  }
  func.func @transform_0(%arg0: i32, %arg1: i32) -> (i32, i32, i32) {
    %c1_i32 = arith.constant 1 : i32
    %0 = arith.muli %arg0, %c1_i32 : i32
    %1 = arith.addi %0, %arg1 : i32
    %c0_i32 = arith.constant 0 : i32
    %c0_i32_0 = arith.constant 0 : i32
    %c0_i32_1 = arith.constant 0 : i32
    return %c0_i32, %1, %c0_i32_0 : i32, i32, i32
  }
  func.func @transform_1(%arg0: i32, %arg1: i32) -> (i32, i32) {
    %c1_i32 = arith.constant 1 : i32
    %0 = arith.muli %arg0, %c1_i32 : i32
    %1 = arith.addi %0, %arg1 : i32
    %c0_i32 = arith.constant 0 : i32
    %c0_i32_0 = arith.constant 0 : i32
    return %1, %c0_i32 : i32, i32
  }
  func.func @transform_2(%arg0: i32, %arg1: i32) -> (i32, i32, i32) {
    %c0_i32 = arith.constant 0 : i32
    %c0_i32_0 = arith.constant 0 : i32
    %c0_i32_1 = arith.constant 0 : i32
    return %arg0, %c0_i32, %c0_i32_0 : i32, i32, i32
  }
}

</mosaic_0001>

<llo_original>
// kernel: qd_loss.1
$region0: #{qd_loss.1}
  #allocation0 [shape = 'u32[]', space=smem, size = 0x4, offset = 0x4, fixed_abs, tag = 'smem constant byte address 0x4 - core index']
  #allocation1 [shape = 'u32[72,128]{1,0:T(1,128)}', space=vmem, size = 0x9000, scoped, tag = 'internal scratch']
  #allocation2 [shape = 'f32[4,8,128]{2,1,0:T(8,128)}', space=vmem, size = 0x4000, scoped, tag = 'scratch operand']
  %s0 = inlined_call_operand.vmem [shape: f32[2,8,128], index: 0, kind: input, shape index: {}]
  %s1 = inlined_call_operand.vmem [shape: f32[8,128], index: 1, kind: input, shape index: {}]
  %s2 = inlined_call_operand.vmem [shape: f32[1,4,128], index: 2, kind: output, shape index: {}]
  %s3 = sld [smem:[#allocation0]]
  $region26: #{qd_loss.1} parent=0
    _
  %s5 = ssub.s32 1, %s3
  %s6 = scalar_select 0, %s5, %s3
  // Predicated region
  $region2: #{qd_loss.1} parent=0 // pred_check
    _
  $region3: #{qd_loss.1} parent=0 // pred_check_branch
    %8 = sbr.rel (0) target = $region5
  $region4: #{qd_loss.1} parent=0 // pred_region
    %s9 = sadd.s32 0, 0
    %p10 = scmp.lt.s32.totalorder %s9, 0
    %s11 = scalar_select %p10, %s9, 0
    %s12 = smul.addr %s11, 8
    %s13 = scalar_lea.vmem %s0, %s12
    %s14 = sadd.s32 0, 0
  $region5: #{qd_loss.1} parent=0 // pred_fallthru
    _
  // Predicated region
  $region6: #{qd_loss.1} parent=0 // pred_check
    _
  $region7: #{qd_loss.1} parent=0 // pred_check_branch
    %16 = sbr.rel (0) target = $region9
  $region8: #{qd_loss.1} parent=0 // pred_region
    %s17 = sadd.s32 0, 0
    %p18 = scmp.lt.s32.totalorder %s17, 0
    %s19 = scalar_select %p18, %s17, 0
    %s20 = smul.addr %s19, 8
    %s21 = scalar_lea.vmem %s1, %s20
    %s22 = sadd.s32 0, 0
  $region9: #{qd_loss.1} parent=0 // pred_fallthru
    _
  %s23 = sadd.s32 0, 0
  %p24 = scmp.lt.s32.totalorder %s23, 0
  %s25 = scalar_select %p24, %s23, 0
  %s26 = smul.addr %s25, 8
  %s27 = scalar_lea.vmem %s0, %s26
  %s28 = sadd.s32 0, 0
  %p29 = scmp.lt.s32.totalorder %s28, 0
  %s30 = scalar_select %p29, %s28, 0
  %s31 = smul.addr %s30, 8
  %s32 = scalar_lea.vmem %s1, %s31
  %s33 = sadd.s32 0, 0
  %p34 = scmp.lt.s32.totalorder %s33, 0
  %s35 = scalar_select %p34, %s33, 0
  %s36 = smul.addr %s35, 8
  %s37 = scalar_lea.vmem %s0, %s36
  %s38 = sadd.s32 0, 0
  %s39 = sadd.s32 0, 0
  %p40 = scmp.lt.s32.totalorder %s39, 0
  %s41 = scalar_select %p40, %s39, 0
  %s42 = smul.addr %s41, 8
  %s43 = scalar_lea.vmem %s1, %s42
  %s44 = sadd.s32 0, 0
  %p45 = scmp.eq.s32.totalorder 0, 0
  // Predicated region
  $region10: #{qd_loss.1} parent=0 // pred_check
    %p46 = pneg %p45
  $region11: #{qd_loss.1} parent=0 // pred_check_branch
    %48 = sbr.rel (%p46) target = $region13
  $region12: #{qd_loss.1} parent=0 // pred_region
    %49 = vst [vmem:[#allocation2] sm:$0xff] 0.0
    %50 = vst [vmem:[#allocation2 + $0x8] sm:$0xff] 0.0
    %51 = vst [vmem:[#allocation2 + $0x10] sm:$0xff] 0.0
    %52 = vst [vmem:[#allocation2 + $0x18] sm:$0xff] 0.0
  $region13: #{qd_loss.1} parent=0 // pred_fallthru
    _
  %v53 = vld [vmem:[%s37] sm:$0xff]
  %s54 = scalar_lea.vmem %s37, 8
  %v55 = vld [vmem:[%s54] sm:$0xff]
  %v56 = vld [vmem:[%s43] sm:$0xff]
  %v57 = vsub.f32 %v53, %v55
  %v58 = vld [vmem:[#allocation2] sm:$0xff]
  %v59 = vadd.f32 %v57, 0.0
  %v60 = vadd.f32 %v58, %v59
  %61 = vst [vmem:[#allocation2] sm:$0xff] %v60
  %vm62 = vcmp.gt.f32.partialorder %v53, %v56
  %vm63 = vcmp.gt.f32.partialorder %v56, %v55
  %vm64 = vmand %vm62, %vm63
  %v65 = vsel %vm64, 1, 0
  %v66 = vcvt.s32.f32 %v65
  %s67 = scalar_lea.vmem [#allocation2], 8
  %v68 = vld [vmem:[%s67] sm:$0xff]
  %v69 = vadd.f32 %v66, 0.0
  %v70 = vadd.f32 %v68, %v69
  %71 = vst [vmem:[%s67] sm:$0xff] %v70
  %s72 = scalar_lea.vmem [#allocation2], 16
  %v73 = vld [vmem:[%s72] sm:$0xff]
  %v74 = vand.u32 2147483647, %v57
  %v75 = vmul.f32 %v74, %v66
  %v76 = vadd.f32 %v75, 0.0
  %v77 = vadd.f32 %v73, %v76
  %78 = vst [vmem:[%s72] sm:$0xff] %v77
  %v79 = vsub.f32 %v53, %v56
  %v80 = vmul.f32 %v79, 50.0
  %v81 = vtanh.pop %v80
  %v82 = vadd.f32 %v81, 1.0
  %v83 = vsub.f32 %v56, %v55
  %v84 = vmul.f32 %v83, 50.0
  %v85 = vtanh.pop %v84
  %v86 = vadd.f32 %v85, 1.0
  %v87 = vmul.f32 %v82, %v86
  %v88 = vmul.f32 %v87, 0.25
  %s89 = scalar_lea.vmem [#allocation2], 24
  %v90 = vld [vmem:[%s89] sm:$0xff]
  %v91 = vadd.f32 %v88, 0.0
  %v92 = vadd.f32 %v90, %v91
  %93 = vst [vmem:[%s89] sm:$0xff] %v92
  // Predicated region
  $region14: #{qd_loss.1} parent=0 // pred_check
    %p94 = pneg %p45
  $region15: #{qd_loss.1} parent=0 // pred_check_branch
    %96 = sbr.rel (%p94) target = $region17
  $region16: #{qd_loss.1} parent=0 // pred_region
    %v97 = vld [vmem:[#allocation2] sm:$0xff]
    %v98 = vld [vmem:[#allocation2 + $0x8] sm:$0xff]
    %v99 = vld [vmem:[#allocation2 + $0x10] sm:$0xff]
    %v100 = vld [vmem:[#allocation2 + $0x18] sm:$0xff]
    %v101 = vrot.slane %v97, 4
    %v102 = vadd.f32 %v97, %v101
    %v103 = vrot.slane %v102, 2
    %v104 = vadd.f32 %v102, %v103
    %v105 = vrot.slane %v104, 1
    %v106 = vadd.f32 %v104, %v105
    %v107 = vrot.slane %v98, 4
    %v108 = vadd.f32 %v98, %v107
    %v109 = vrot.slane %v108, 2
    %v110 = vadd.f32 %v108, %v109
    %v111 = vrot.slane %v110, 1
    %v112 = vadd.f32 %v110, %v111
    %v113 = vrot.slane %v99, 4
    %v114 = vadd.f32 %v99, %v113
    %v115 = vrot.slane %v114, 2
    %v116 = vadd.f32 %v114, %v115
    %v117 = vrot.slane %v116, 1
    %v118 = vadd.f32 %v116, %v117
    %v119 = vrot.slane %v100, 4
    %v120 = vadd.f32 %v100, %v119
    %v121 = vrot.slane %v120, 2
    %v122 = vadd.f32 %v120, %v121
    %v123 = vrot.slane %v122, 1
    %v124 = vadd.f32 %v122, %v123
    %vm129 = vcmask 1041409
    %v130 = vsel %vm129, %v112, %v106
    %vm131 = vcmask 1042434
    %v132 = vsel %vm131, %v118, %v130
    %vm133 = vcmask 1043459
    %v134 = vsel %vm133, %v124, %v132
    %136 = vst [vmem:[%s2] sm:$0xf] %v134
  $region17: #{qd_loss.1} parent=0 // pred_fallthru
    _
  // Predicated region
  $region18: #{qd_loss.1} parent=0 // pred_check
    _
  $region19: #{qd_loss.1} parent=0 // pred_check_branch
    %138 = sbr.rel (0) target = $region21
  $region20: #{qd_loss.1} parent=0 // pred_region
    _
  $region21: #{qd_loss.1} parent=0 // pred_fallthru
    _
  // Predicated region
  $region22: #{qd_loss.1} parent=0 // pred_check
    _
  $region23: #{qd_loss.1} parent=0 // pred_check_branch
    %140 = sbr.rel (0) target = $region25
  $region24: #{qd_loss.1} parent=0 // pred_region
    _
  $region25: #{qd_loss.1} parent=0 // pred_fallthru
    _

</llo_original>
